<compile_context>
chip_gen: v5e
topology: v5e:2x2
jax: 0.10.0
libtpu: 0.0.40
codegen_flags: <defaults>
</compile_context>

<pallas_src>
import functools

import jax
import jax.numpy as jnp
from jax import lax
from jax.experimental import pallas as pl
from jax.experimental.pallas import tpu as pltpu


# ----------------------------------------------------------------------------
# Kernel 1: adaLN modulation.  Stores (1 + scale) so the main kernel skips the
# per-tile "+1".  Gridded over output-feature tiles of W_mod.
#   scale = SiLU(c) @ W_mod^T + b_mod,   c: (N, hidden)
# ----------------------------------------------------------------------------
def _adaln_kernel(c_ref, w_ref, b_ref, s_ref):
    c = c_ref[...].astype(jnp.float32)
    h = c * jax.nn.sigmoid(c)                                 # SiLU (EUP)
    # h @ W^T with W kept in PyTorch (out, in) layout -> contract last dims.
    y = lax.dot_general(h.astype(w_ref.dtype), w_ref[...],
                        dimension_numbers=(((1,), (1,)), ((), ())),
                        preferred_element_type=jnp.float32)
    s_ref[...] = y + b_ref[...].astype(jnp.float32) + 1.0     # store 1 + scale


def _adaln_one_plus_scale(c, w_mod, b_mod, *, tn=512):
    N, D = c.shape
    tn_eff = D if D <= tn else tn            # tn (512) is a multiple of 128
    return pl.pallas_call(
        _adaln_kernel,
        out_shape=jax.ShapeDtypeStruct((N, D), jnp.float32),
        grid_spec=pltpu.PrefetchScalarGridSpec(
            num_scalar_prefetch=0,
            grid=(pl.cdiv(D, tn_eff),),
            in_specs=[
                pl.BlockSpec((N, D), lambda j: (0, 0)),       # c (resident)
                pl.BlockSpec((tn_eff, D), lambda j: (j, 0)),  # W_mod row-tile
                pl.BlockSpec((1, tn_eff), lambda j: (0, j)),  # bias tile
            ],
            out_specs=pl.BlockSpec((N, tn_eff), lambda j: (0, j)),
        ),
        compiler_params=pltpu.CompilerParams(
            dimension_semantics=("parallel",)),
    )(c, w_mod, b_mod.reshape(1, D))


# ----------------------------------------------------------------------------
# Kernel 2: fused LayerNorm (eps=1e-6, no affine) + modulate + Linear(+bias),
# with a lane-dense transposed output (out_dim, tm).
# Grid = (batch, token-tile); both axes independent -> "parallel".
# ----------------------------------------------------------------------------
def _final_layer_kernel(x_ref, s_ref, w_ref, b_ref, o_ref, *, eps):
    n = pl.program_id(0)
    x = x_ref[0].astype(jnp.float32)                          # (tm, D)
    inv_d = 1.0 / x.shape[-1]
    mean = jnp.sum(x, axis=-1, keepdims=True) * inv_d         # (tm, 1)
    mean_sq = jnp.sum(x * x, axis=-1, keepdims=True) * inv_d  # (tm, 1)
    var = jnp.maximum(mean_sq - mean * mean, 0.0)             # one-pass stats
    a = lax.rsqrt(var + eps)                                  # (tm, 1)
    scale1p = s_ref[pl.ds(n, 1), :]                           # (1, D), = 1+scale
    xm = ((x - mean) * a) * scale1p                           # LN + modulate
    # Transposed projection: W (out_dim, D) x xm (tm, D) contracted over D
    # -> (out_dim, tm): tm sits on the lane axis, stores are unmasked.
    y = lax.dot_general(w_ref[...], xm.astype(w_ref.dtype),
                        dimension_numbers=(((1,), (1,)), ((), ())),
                        preferred_element_type=jnp.float32)
    o_ref[0] = (y + b_ref[...].astype(jnp.float32)).astype(o_ref.dtype)


def final_layer_pallas(x, c, w_lin, b_lin, w_mod, b_mod, *, tm=256, eps=1e-6):
    """Forward pass of FinalLayer.

    Args:
      x:     (N, T, hidden) tokens.
      c:     (N, hidden) conditioning.
      w_lin: (out_dim, hidden)  -- self.linear.weight (PyTorch layout)
      b_lin: (out_dim,)         -- self.linear.bias
      w_mod: (hidden, hidden)   -- adaLN_modulation[1].weight
      b_mod: (hidden,)          -- adaLN_modulation[1].bias
    Returns:
      (N, T, out_dim), dtype of x.
    """
    N, T, D = x.shape
    out_dim = w_lin.shape[0]

    # --- adaLN: per-batch (1 + scale), f32, kept resident by the main call. -
    scale1p = _adaln_one_plus_scale(c, w_mod, b_mod)          # (N, D) f32

    # --- token tiling: no wrapper-side pad; ragged tail handled by Pallas
    # edge-block masking (all per-token ops are row-wise).
    if T <= tm:
        tm_eff = T                       # full axis -> no divisibility needs
    else:
        assert tm % 128 == 0, "tm must be a multiple of 128 when sub-tiling"
        tm_eff = tm

    grid = (N, pl.cdiv(T, tm_eff))

    # VMEM budget: double-buffered x / out tiles + resident weights + f32
    # LN/modulate intermediates; capped at 64 MiB (valid on v7x too).
    itemsize = x.dtype.itemsize
    vmem_est = (2 * tm_eff * D * itemsize
                + 2 * out_dim * tm_eff * itemsize
                + out_dim * D * w_lin.dtype.itemsize
                + N * D * 4 + out_dim * 4
                + 6 * tm_eff * D * 4)
    vmem_limit = int(min(64 * 1024 * 1024, max(32 * 1024 * 1024, vmem_est)))

    out_t = pl.pallas_call(
        functools.partial(_final_layer_kernel, eps=eps),
        out_shape=jax.ShapeDtypeStruct((N, out_dim, T), x.dtype),
        grid_spec=pltpu.PrefetchScalarGridSpec(
            num_scalar_prefetch=0,
            grid=grid,
            in_specs=[
                pl.BlockSpec((1, tm_eff, D), lambda n, t: (n, t, 0)),  # x slab
                pl.BlockSpec((N, D), lambda n, t: (0, 0)),        # 1+scale (resident)
                pl.BlockSpec((out_dim, D), lambda n, t: (0, 0)),  # W (resident)
                pl.BlockSpec((out_dim, 1), lambda n, t: (0, 0)),  # bias
            ],
            out_specs=pl.BlockSpec((1, out_dim, tm_eff), lambda n, t: (n, 0, t)),
        ),
        compiler_params=pltpu.CompilerParams(
            dimension_semantics=("parallel", "parallel"),
            vmem_limit_bytes=vmem_limit),
    )(x, scale1p, w_lin, b_lin.reshape(out_dim, 1))

    # Tiny (N, out_dim, T) -> (N, T, out_dim); in a real model this folds into
    # the downstream unpatchify reshape.
    return jnp.swapaxes(out_t, 1, 2)


# ----------------------------------------------------------------------------
# Pure-JAX reference mirroring the PyTorch module.
# ----------------------------------------------------------------------------
def reference_final_layer(x, c, w_lin, b_lin, w_mod, b_mod, eps=1e-6):
    silu_c = c * jax.nn.sigmoid(c)
    scale = silu_c @ w_mod.T + b_mod                          # adaLN_modulation
    mean = jnp.mean(x, axis=-1, keepdims=True)
    var = jnp.mean((x - mean) ** 2, axis=-1, keepdims=True)
    xn = (x - mean) / jnp.sqrt(var + eps)                     # LayerNorm, no affine
    xm = xn * (1.0 + scale[:, None, :])                       # modulate
    return xm @ w_lin.T + b_lin                               # final Linear


if __name__ == "__main__":
    key = jax.random.PRNGKey(0)
    kx, kc, kw1, kb1, kw2, kb2 = jax.random.split(key, 6)

    # Small shapes consistent with the module.
    batch, seq, hidden = 2, 8, 32
    patch_size = (2, 2)
    out_channels = 4
    out_dim = patch_size[0] * patch_size[1] * out_channels  # = 16

    x = jax.random.normal(kx, (batch, seq, hidden), dtype=jnp.float32)
    c = jax.random.normal(kc, (batch, hidden), dtype=jnp.float32)

    # NOTE: the PyTorch module zero-initializes both Linear layers (forward
    # would be identically 0); use non-trivial random weights so the
    # correctness check is meaningful.
    w_lin = 0.02 * jax.random.normal(kw1, (out_dim, hidden), jnp.float32)
    b_lin = 0.02 * jax.random.normal(kb1, (out_dim,), jnp.float32)
    w_mod = 0.02 * jax.random.normal(kw2, (hidden, hidden), jnp.float32)
    b_mod = 0.02 * jax.random.normal(kb2, (hidden,), jnp.float32)

    out = final_layer_pallas(x, c, w_lin, b_lin, w_mod, b_mod)
    out = jax.block_until_ready(out)

    ref = reference_final_layer(x, c, w_lin, b_lin, w_mod, b_mod)
    assert out.shape == (batch, seq, out_dim)
    assert jnp.allclose(out, ref, atol=2e-5, rtol=2e-5), "mismatch vs reference"

    print("KERNEL_OK")
</pallas_src>

<mosaic_0001>
module attributes {stable_mosaic.version = 11 : i64} {
  func.func @_adaln_kernel(%arg0: i32, %arg1: memref<2x32xf32, #tpu.memory_space<vmem>>, %arg2: memref<32x32xf32, #tpu.memory_space<vmem>>, %arg3: memref<1x32xf32, #tpu.memory_space<vmem>>, %arg4: memref<2x32xf32, #tpu.memory_space<vmem>>) attributes {dimension_semantics = [#tpu.dimension_semantics<parallel>], iteration_bounds = array<i64: 1>, scalar_prefetch = 0 : i64, scratch_operands = 0 : i64, tpu.core_type = #tpu.core_type<tc>, window_params = [{pipeline_mode = #tpu.pipeline_mode<synchronous>, transform_indices = @transform_0, window_bounds = array<i64: 2, 32>}, {transform_indices = @transform_1, window_bounds = array<i64: 32, 32>}, {transform_indices = @transform_2, window_bounds = array<i64: 1, 32>}, {transform_indices = @transform_3, window_bounds = array<i64: 2, 32>}]} {
    %c0 = arith.constant 0 : index
    %c0_0 = arith.constant 0 : index
    %0 = vector.load %arg1[%c0, %c0_0] : memref<2x32xf32, #tpu.memory_space<vmem>>, vector<2x32xf32>
    %1 = arith.negf %0 : vector<2x32xf32>
    %2 = math.exp %1 : vector<2x32xf32>
    %cst = arith.constant 1.000000e+00 : f32
    %3 = vector.broadcast %cst : f32 to vector<2x32xf32>
    %4 = arith.addf %3, %2 : vector<2x32xf32>
    %5 = arith.divf %3, %4 : vector<2x32xf32>
    %6 = arith.mulf %0, %5 : vector<2x32xf32>
    %c0_1 = arith.constant 0 : index
    %c0_2 = arith.constant 0 : index
    %7 = vector.load %arg2[%c0_1, %c0_2] : memref<32x32xf32, #tpu.memory_space<vmem>>, vector<32x32xf32>
    %cst_3 = arith.constant dense<0.000000e+00> : vector<2x32xf32>
    %8 = tpu.matmul %6, %7, %cst_3 {dimension_numbers = #tpu.dot_dimension_numbers<[1], [1], [0], [0], [0, 0, 1, 0], [], []>} : vector<2x32xf32>, vector<32x32xf32>, vector<2x32xf32> -> vector<2x32xf32>
    %c0_4 = arith.constant 0 : index
    %c0_5 = arith.constant 0 : index
    %9 = vector.load %arg3[%c0_4, %c0_5] : memref<1x32xf32, #tpu.memory_space<vmem>>, vector<1x32xf32>
    %10 = vector.broadcast %9 : vector<1x32xf32> to vector<2x32xf32>
    %11 = arith.addf %8, %10 : vector<2x32xf32>
    %cst_6 = arith.constant 1.000000e+00 : f32
    %12 = vector.broadcast %cst_6 : f32 to vector<2x32xf32>
    %13 = arith.addf %11, %12 : vector<2x32xf32>
    %c0_7 = arith.constant 0 : index
    %c0_8 = arith.constant 0 : index
    %14 = vector.load %arg4[%c0_7, %c0_8] : memref<2x32xf32, #tpu.memory_space<vmem>>, vector<2x32xf32>
    tpu.vector_store %arg4[%c0_7, %c0_8], %13 {strides = array<i32>} : memref<2x32xf32, #tpu.memory_space<vmem>>, vector<2x32xf32>,
    return
  }
  func.func @transform_0(%arg0: i32) -> (i32, i32) {
    %c0_i32 = arith.constant 0 : i32
    %c0_i32_0 = arith.constant 0 : i32
    %c0_i32_1 = arith.constant 0 : i32
    return %c0_i32, %c0_i32_0 : i32, i32
  }
  func.func @transform_1(%arg0: i32) -> (i32, i32) {
    %c0_i32 = arith.constant 0 : i32
    %c0_i32_0 = arith.constant 0 : i32
    return %arg0, %c0_i32 : i32, i32
  }
  func.func @transform_2(%arg0: i32) -> (i32, i32) {
    %c0_i32 = arith.constant 0 : i32
    %c0_i32_0 = arith.constant 0 : i32
    return %c0_i32, %arg0 : i32, i32
  }
  func.func @transform_3(%arg0: i32) -> (i32, i32) {
    %c0_i32 = arith.constant 0 : i32
    %c0_i32_0 = arith.constant 0 : i32
    return %c0_i32, %arg0 : i32, i32
  }
}

</mosaic_0001>

<llo_original>
// kernel: tpu_custom_call.1
$region0: #{tpu_custom_call.1}
  #allocation0 [shape = 'u32[]', space=smem, size = 0x4, offset = 0x4, fixed_abs, tag = 'smem constant byte address 0x4 - core index']
  #allocation1 [shape = 'u32[72,128]{1,0:T(1,128)}', space=vmem, size = 0x9000, scoped, tag = 'internal scratch']
  %s0 = inlined_call_operand.hbm [shape: f32[2,32], index: 0, kind: input, shape index: {}]
  %s1 = inlined_call_operand.hbm [shape: f32[32,32], index: 1, kind: input, shape index: {}]
  %s2 = inlined_call_operand.vmem [shape: f32[1,32], index: 2, kind: input, shape index: {}]
  %s3 = inlined_call_operand.hbm [shape: f32[2,32], index: 3, kind: output, shape index: {}]
  %s4 = sld [smem:[#allocation0]]
  $region30: #{tpu_custom_call.1} parent=0
    _
  %s6 = ssub.s32 1, %s4
  %s7 = scalar_select 0, %s6, %s4
  $region1: #{tpu_custom_call.1} parent=0
    #allocation2 [shape = 'u8[1024]{0}', space=vmem, size = 0x400, scoped, tag = 'input window, operand 0, single buffered']
    #allocation3 [shape = 's32[1]{0}', space=sflag, size = 0x4, scoped, tag = 'scoped memory for tpu_custom_call.1']
    #allocation4 [shape = 's32[1]{0}', space=sflag, size = 0x4, scoped, tag = 'scoped memory for tpu_custom_call.1']
    #allocation5 [shape = 'u8[16384]{0}', space=vmem, size = 0x4000, scoped, tag = 'input window, operand 1, single buffered']
    #allocation6 [shape = 's32[1]{0}', space=sflag, size = 0x4, scoped, tag = 'scoped memory for tpu_custom_call.1']
    #allocation7 [shape = 'u8[1024]{0}', space=vmem, size = 0x400, scoped, tag = 'output window, operand 0, single buffered']
    %8 = vsyncpa [#allocation3], 0
    %9 = vsyncpa [#allocation6], 0
    %10 = vsyncpa [#allocation4], 0
    // Predicated region
    $region2: #{tpu_custom_call.1} parent=1 // pred_check
      _
    $region3: #{tpu_custom_call.1} parent=1 // pred_check_branch
      %12 = sbr.rel (0) target = $region5
    $region4: #{tpu_custom_call.1} parent=1 // pred_region
      %14 = vsyncadd [#allocation3], 0
      %s16 = sshll.u32 %s0, 4
      %s17 = int_to_ptr.hbm [resolvable:$true] %s16
      %s18 = sshll.u32 [#allocation2], 4
      %s19 = int_to_ptr.vmem [resolvable:$true] %s18
      %21 = dma.hbm_to_vmem [thread:$0]  %s17, 32, %s19, [#allocation3]
    $region5: #{tpu_custom_call.1} parent=1 // pred_fallthru
      _
    // Predicated region
    $region6: #{tpu_custom_call.1} parent=1 // pred_check
      _
    $region7: #{tpu_custom_call.1} parent=1 // pred_check_branch
      %23 = sbr.rel (0) target = $region9
    $region8: #{tpu_custom_call.1} parent=1 // pred_region
      %25 = vsyncadd [#allocation6], 0
      %s26 = sshll.u32 %s1, 4
      %s27 = int_to_ptr.hbm [resolvable:$true] %s26
      %s28 = sshll.u32 [#allocation5], 4
      %s29 = int_to_ptr.vmem [resolvable:$true] %s28
      %34 = dma.hbm_to_vmem [thread:$0]  %s27, 512, %s29, [#allocation6], 128, 128, 8
    $region9: #{tpu_custom_call.1} parent=1 // pred_fallthru
      _
    // Predicated region
    $region10: #{tpu_custom_call.1} parent=1 // pred_check
      _
    $region11: #{tpu_custom_call.1} parent=1 // pred_check_branch
      %36 = sbr.rel (0) target = $region13
    $region12: #{tpu_custom_call.1} parent=1 // pred_region
      _
    $region13: #{tpu_custom_call.1} parent=1 // pred_fallthru
      _
    // Predicated region
    $region14: #{tpu_custom_call.1} parent=1 // pred_check
      _
    $region15: #{tpu_custom_call.1} parent=1 // pred_check_branch
      %38 = sbr.rel (0) target = $region17
    $region16: #{tpu_custom_call.1} parent=1 // pred_region
      %40 = dma.done [#allocation3], 32
    $region17: #{tpu_custom_call.1} parent=1 // pred_fallthru
      _
    // Predicated region
    $region18: #{tpu_custom_call.1} parent=1 // pred_check
      _
    $region19: #{tpu_custom_call.1} parent=1 // pred_check_branch
      %42 = sbr.rel (0) target = $region21
    $region20: #{tpu_custom_call.1} parent=1 // pred_region
      %44 = dma.done [#allocation6], 512
    $region21: #{tpu_custom_call.1} parent=1 // pred_fallthru
      _
    %v45 = vld [vmem:[#allocation2] sm:$0x3]
    %v46 = vxor.u32 %v45, 2147483648
    %v47 = vmul.f32 %v46, 1.442695
    %v48 = vpow.pop %v47
    %v49 = vadd.f32 %v48, 1.0
    %v50 = vrcp.pop %v49
    %v51 = vmul.f32 %v49, %v50
    %v52 = vsub.f32 1.0, %v51
    %v53 = vmul.f32 %v50, %v52
    %v54 = vadd.f32 %v50, %v53
    %vm55 = vweird.f32 %v49
    %vm56 = vweird.f32 %v50
    %vm57 = vmor %vm55, %vm56
    %v58 = vsel %vm57, %v50, %v54
    %v59 = vand.u32 2147483647, %v49
    %vm60 = vcmp.eq.f32.partialorder %v59, 8.507059e+37
    %v61 = vand.u32 %v49, 2147483648
    %v62 = vor.u32 1.1754944e-38, %v61
    %v63 = vsel %vm60, %v62, %v58
    %v64 = vmul.f32 1.0, %v63
    %v65 = vmul.f32 %v45, %v64
    %v66 = vld [vmem:[#allocation5] sm:$0xff]
    %v67 = vld [vmem:[#allocation5 + $0x8] sm:$0xff]
    %v68 = vld [vmem:[#allocation5 + $0x10] sm:$0xff]
    %v69 = vld [vmem:[#allocation5 + $0x18] sm:$0xff]
    %v70 = vld [vmem:[%s2] sm:$0x1]
    %v72 = vperm.slane %v70, 0
    %vm74 = vcmask 261120
    %v76 = vsel %vm74, %v65, 0
    %v79 = vsel %vm74, %v66, 0
    %v82 = vsel %vm74, %v67, 0
    %v85 = vsel %vm74, %v68, 0
    %v88 = vsel %vm74, %v69, 0
    %90 = vmatpush.xpose.msra.mxu0 0.0
    %91 = vmatpush.xpose.msra.mxu0 0.0
    %92 = vmatpush.xpose.msra.mxu0 0.0
    %93 = vmatpush.xpose.msra.mxu0 0.0
    %94 = vmatpush.xpose.msra.mxu0 0.0
    %95 = vmatpush.xpose.msra.mxu0 0.0
    %96 = vmatpush.xpose.msra.mxu0 0.0
    %97 = vmatpush.xpose.msra.mxu0 0.0
    %98 = vmatpush.xpose.msra.mxu0 0.0
    %99 = vmatpush.xpose.msra.mxu0 0.0
    %100 = vmatpush.xpose.msra.mxu0 0.0
    %101 = vmatpush.xpose.msra.mxu0 0.0
    %102 = vmatpush.xpose.msra.mxu0 %v88
    %103 = vmatpush.xpose.msra.mxu0 %v85
    %104 = vmatpush.xpose.msra.mxu0 %v82
    %105 = vmatpush.xpose.msra.mxu0 %v79
    %106 = vmatmul.f32.gmra.mxu0 %v76
    %v107 = vpop.f32.mrf.mxu0
    %v108 = vadd.f32 %v72, %v107
    %109 = vdwg.mxu0
    %v110 = vadd.f32 %v108, 1.0
    %vm111 = vcmask 254976
    %112 = vst.msk [vmem:[#allocation7] sm:$0x3] %vm111, %v110
    // Predicated region
    $region22: #{tpu_custom_call.1} parent=1 // pred_check
      _
    $region23: #{tpu_custom_call.1} parent=1 // pred_check_branch
      %114 = sbr.rel (0) target = $region25
    $region24: #{tpu_custom_call.1} parent=1 // pred_region
      %116 = vsyncadd [#allocation4], 0
      %s118 = sshll.u32 [#allocation7], 4
      %s119 = int_to_ptr.vmem [resolvable:$true] %s118
      %s120 = sshll.u32 %s3, 4
      %s121 = int_to_ptr.hbm [resolvable:$true] %s120
      %123 = dma.vmem_to_hbm [thread:$0]  %s119, 32, %s121, [#allocation4]
    $region25: #{tpu_custom_call.1} parent=1 // pred_fallthru
      _
    // Predicated region
    $region26: #{tpu_custom_call.1} parent=1 // pred_check
      _
    $region27: #{tpu_custom_call.1} parent=1 // pred_check_branch
      %125 = sbr.rel (0) target = $region29
    $region28: #{tpu_custom_call.1} parent=1 // pred_region
      %127 = dma.done [#allocation4], 32
    $region29: #{tpu_custom_call.1} parent=1 // pred_fallthru
      _
    %128 = vsyncpa [#allocation3], 1
    %129 = vsyncpa [#allocation6], 1
    %130 = vsyncpa [#allocation4], 1

</llo_original>
